<compile_context>
chip_gen: v7x
topology: tpu7x:2x2x1
jax: 0.10.0
libtpu: 0.0.40
codegen_flags: <defaults>
</compile_context>

<pallas_src>
import math

import jax
import jax.numpy as jnp
from jax import lax
from jax.experimental import pallas as pl
from jax.experimental.pallas import tpu as pltpu

LANES = 128
ROW_ALIGN = 32        # block sublane multiple valid for f32(8) / bf16,f16(16) / int8,fp8(32)
TILE_ROWS_MAX = 8192  # (8192,128) f32 block = 4 MiB; 2 inputs x 2 buffers = 16 MiB VMEM
CHUNK_ROWS = 2048     # in-kernel compute chunk: bounds elementwise temporaries to ~1 MiB
MIN_SHARD_ROWS = 512  # engage the 2-TensorCore split only when each shard gets >= 512 rows


def _round_up(x: int, m: int) -> int:
    return ((x + m - 1) // m) * m


def _hw_num_shards() -> int:
    """Best-effort TensorCores-per-chip. The 2-way split is work-identical on a
    single-TC chip (same DMA, no per-step mask), so unknown chips default to 2;
    return 1 only for chips known to have one TensorCore (v5e / v6e)."""
    try:
        dev = jax.devices()[0]
        if getattr(dev, "platform", "") != "tpu":
            return 1
        kind = getattr(dev, "device_kind", "").lower()
        if ("v5e" in kind) or ("v5 lite" in kind) or ("v5lite" in kind) or ("v6" in kind):
            return 1
        return 2
    except Exception:
        return 2


def _make_kernel(*, eps, inv_scale, tile_rows, tiles_per_shard, m_rows, needs_mask):
    # Static (start, size) chunk list; sizes are multiples of 32 (ROW_ALIGN).
    chunks = []
    r = 0
    while r < tile_rows:
        sz = min(CHUNK_ROWS, tile_rows - r)
        chunks.append((r, sz))
        r += sz

    def kernel(im_ref, ref_ref, out_ref, acc_ref):
        s = pl.program_id(0)  # shard axis: one per TensorCore on 2-TC chips
        i = pl.program_id(1)  # row-tile index within the shard (reduction axis)

        @pl.when(i == 0)
        def _init():
            acc_ref[...] = jnp.zeros_like(acc_ref)

        tile_row0 = (s * tiles_per_shard + i) * tile_rows  # first logical row of this tile

        for (r0, sz) in chunks:
            im = im_ref[pl.ds(r0, sz), :].astype(jnp.float32)
            rf = ref_ref[pl.ds(r0, sz), :].astype(jnp.float32)
            diff = im - rf
            # f32 divide is a multi-op VALU sequence; the approx reciprocal goes to
            # the EUP slot (separate VLIW slot) and is effectively free here.
            contrib = (diff * diff) * pl.reciprocal(rf * rf + eps, approx=True)

            def _fold(x, sz=sz):
                # (sz,128) -> (8,128): VPU adds across vregs; keeps the accumulator
                # and the per-step VMEM store traffic at one vreg-sized tile.
                return x.reshape(sz // 8, 8, LANES).sum(axis=0)

            if not needs_mask:
                acc_ref[...] += _fold(contrib)
            else:
                c_row0 = tile_row0 + r0

                def _acc_full(contrib=contrib, _fold=_fold):
                    acc_ref[...] += _fold(contrib)

                def _acc_ragged(contrib=contrib, _fold=_fold, c_row0=c_row0, sz=sz):
                    # Mask BEFORE accumulating: the select discards any garbage
                    # (even NaN/Inf) from the unfetched part of a partial block.
                    rows = c_row0 + lax.broadcasted_iota(jnp.int32, (sz, LANES), 0)
                    acc_ref[...] += _fold(jnp.where(rows < m_rows, contrib, 0.0))

                # Fast path (no iota/where) for full chunks; the masked path runs on
                # at most ONE chunk of the whole grid; fully out-of-range chunks
                # (overhanging / clamped duplicate tiles) are skipped entirely.
                pl.when(c_row0 + sz <= m_rows)(_acc_full)
                pl.when(jnp.logical_and(c_row0 < m_rows, c_row0 + sz > m_rows))(_acc_ragged)

        @pl.when(i == tiles_per_shard - 1)
        def _finalize():
            out_ref[...] = acc_ref[...] * inv_scale  # 0.5/n folded into one scale

    return kernel


def relative_mse(im: jax.Array, ref: jax.Array, eps: float = 0.01) -> jax.Array:
    assert im.shape == ref.shape, "im and ref must have the same shape"
    n = math.prod(im.shape)
    assert n > 0

    # Keep sub-32-bit float dtypes native (halves HBM read bytes); only coerce
    # non-float / 64-bit inputs. The f32 upcast happens per-chunk in the kernel.
    def _coerce(x):
        dt = jnp.dtype(x.dtype)
        if (not jnp.issubdtype(dt, jnp.floating)) or dt.itemsize > 4:
            return x.astype(jnp.float32)
        return x

    im_f = jnp.ravel(_coerce(im))
    ref_f = jnp.ravel(_coerce(ref))

    # Host zero-pad ONLY when the flat length is not lane-aligned (n % 128 != 0);
    # zero padding is exact for this metric: (0-0)^2/(0+eps) == 0.
    # TODO(synk): a lane-masked 1-D path could avoid this copy for ragged n; the
    # lane-dense 2-D layout is kept because it is the proven fast layout.
    padded = _round_up(n, LANES)
    if padded != n:
        im_f = jnp.pad(im_f, (0, padded - n))
        ref_f = jnp.pad(ref_f, (0, padded - n))
    m_rows = padded // LANES
    im2d = im_f.reshape(m_rows, LANES)
    ref2d = ref_f.reshape(m_rows, LANES)

    # 2-way "parallel" shard axis for 2-TC chips on mid/large inputs; known
    # single-TC chips (v5e/v6e) and small inputs use a single shard.
    num_shards = _hw_num_shards() if m_rows >= 2 * MIN_SHARD_ROWS else 1

    rows_per_shard = _round_up(pl.cdiv(m_rows, num_shards), ROW_ALIGN)
    tiles_per_shard = pl.cdiv(rows_per_shard, TILE_ROWS_MAX)
    tile_rows = min(TILE_ROWS_MAX,
                    _round_up(pl.cdiv(rows_per_shard, tiles_per_shard), ROW_ALIGN))
    nblocks = pl.cdiv(m_rows, tile_rows)             # valid row-blocks in the input
    covered = num_shards * tiles_per_shard * tile_rows
    needs_mask = covered != m_rows                   # exactly-covered inputs skip all mask code

    def in_map(s, i):
        # Clamp so a (rare, huge-input-only) trailing out-of-range tile maps to a
        # valid block; its logical rows are >= m_rows so the kernel skips it.
        return (jnp.minimum(s * tiles_per_shard + i, nblocks - 1), 0)

    kernel = _make_kernel(
        eps=float(eps),
        inv_scale=0.5 / float(n),
        tile_rows=tile_rows,
        tiles_per_shard=tiles_per_shard,
        m_rows=m_rows,
        needs_mask=needs_mask,
    )

    out = pl.pallas_call(
        kernel,
        out_shape=jax.ShapeDtypeStruct((num_shards * 8, LANES), jnp.float32),
        grid_spec=pltpu.PrefetchScalarGridSpec(
            num_scalar_prefetch=0,
            grid=(num_shards, tiles_per_shard),
            in_specs=[
                pl.BlockSpec((tile_rows, LANES), in_map),
                pl.BlockSpec((tile_rows, LANES), in_map),
            ],
            out_specs=pl.BlockSpec((8, LANES), lambda s, i: (s, 0)),
            scratch_shapes=[pltpu.VMEM((8, LANES), jnp.float32)],
        ),
        compiler_params=pltpu.CompilerParams(
            dimension_semantics=("parallel", "arbitrary"),
            vmem_limit_bytes=32 * 1024 * 1024,
        ),
    )(im2d, ref2d)

    # Tiny (num_shards*8, 128) partial-sum slab -> scalar.
    return jnp.sum(out)


def relative_mse_reference(im, ref, eps: float = 0.01):
    imf = im.astype(jnp.float32)
    rff = ref.astype(jnp.float32)
    mse = jnp.square(imf - rff)
    return 0.5 * jnp.mean(mse / (jnp.square(rff) + eps))


if __name__ == "__main__":
    key = jax.random.PRNGKey(0)
    k1, k2, k3, k4, k5, k6 = jax.random.split(key, 6)

    # Small NCHW image-like inputs (matches the PyTorch usage).
    im = jax.random.normal(k1, (2, 4, 16, 16), dtype=jnp.float32)
    ref = jax.random.normal(k2, (2, 4, 16, 16), dtype=jnp.float32)
    out = jax.block_until_ready(relative_mse(im, ref, eps=0.01))
    expected = relative_mse_reference(im, ref, eps=0.01)
    assert jnp.allclose(out, expected, rtol=5e-3, atol=1e-6), (out, expected)

    # Larger odd-row-count input: exercises the multi-tile / sharded /
    # ragged-boundary-chunk path (approx reciprocal + sum order -> loose rtol).
    im2 = jax.random.normal(k3, (2, 3, 240, 240), dtype=jnp.float32)
    ref2 = jax.random.normal(k4, (2, 3, 240, 240), dtype=jnp.float32)
    out2 = jax.block_until_ready(relative_mse(im2, ref2, eps=0.01))
    expected2 = relative_mse_reference(im2, ref2, eps=0.01)
    assert jnp.allclose(out2, expected2, rtol=5e-3, atol=1e-6), (out2, expected2)

    # Native bf16 inputs (kernel upcasts per-chunk in VMEM; halves HBM reads).
    im3 = jax.random.normal(k5, (4, 3, 64, 64), dtype=jnp.bfloat16)
    ref3 = jax.random.normal(k6, (4, 3, 64, 64), dtype=jnp.bfloat16)
    out3 = jax.block_until_ready(relative_mse(im3, ref3, eps=0.01))
    expected3 = relative_mse_reference(im3, ref3, eps=0.01)
    assert jnp.allclose(out3, expected3, rtol=5e-3, atol=1e-6), (out3, expected3)

    # Non-lane-aligned size: exercises the zero-pad + in-kernel row-mask path.
    im4 = jax.random.normal(k1, (5, 7, 11), dtype=jnp.float32)
    ref4 = jax.random.normal(k2, (5, 7, 11), dtype=jnp.float32)
    out4 = jax.block_until_ready(relative_mse(im4, ref4, eps=0.01))
    expected4 = relative_mse_reference(im4, ref4, eps=0.01)
    assert jnp.allclose(out4, expected4, rtol=5e-3, atol=1e-6), (out4, expected4)

    print("KERNEL_OK")
</pallas_src>

<mosaic_0001>
module attributes {stable_mosaic.version = 11 : i64} {
  func.func @kernel(%arg0: i32, %arg1: i32, %arg2: memref<32x128xf32, #tpu.memory_space<vmem>>, %arg3: memref<32x128xf32, #tpu.memory_space<vmem>>, %arg4: memref<8x128xf32, #tpu.memory_space<vmem>>, %arg5: memref<8x128xf32, #tpu.memory_space<vmem>>) attributes {dimension_semantics = [#tpu.dimension_semantics<parallel>, #tpu.dimension_semantics<arbitrary>], iteration_bounds = array<i64: 1, 1>, scalar_prefetch = 0 : i64, scratch_operands = 1 : i64, tpu.core_type = #tpu.core_type<tc>, window_params = [{transform_indices = @transform_0, window_bounds = array<i64: 32, 128>}, {transform_indices = @transform_1, window_bounds = array<i64: 32, 128>}, {transform_indices = @transform_2, window_bounds = array<i64: 8, 128>}]} {
    %c0_i32 = arith.constant 0 : i32
    %0 = arith.cmpi eq, %arg1, %c0_i32 : i32
    %1 = arith.extui %0 : i1 to i32
    %c0_i32_0 = arith.constant 0 : i32
    %2 = arith.cmpi ne, %1, %c0_i32_0 : i32
    scf.if %2 {
      %cst_13 = arith.constant 0.000000e+00 : f32
      %29 = vector.broadcast %cst_13 : f32 to vector<8x128xf32>
      %c0_14 = arith.constant 0 : index
      %c0_15 = arith.constant 0 : index
      %30 = vector.load %arg5[%c0_14, %c0_15] : memref<8x128xf32, #tpu.memory_space<vmem>>, vector<8x128xf32>
      tpu.vector_store %arg5[%c0_14, %c0_15], %29 {strides = array<i32>} : memref<8x128xf32, #tpu.memory_space<vmem>>, vector<8x128xf32>,
    } else {
    }
    %c1_i32 = arith.constant 1 : i32
    %3 = arith.muli %arg0, %c1_i32 : i32
    %4 = arith.addi %3, %arg1 : i32
    %c32_i32 = arith.constant 32 : i32
    %5 = arith.muli %4, %c32_i32 : i32
    %c0 = arith.constant 0 : index
    %c0_1 = arith.constant 0 : index
    %6 = vector.load %arg2[%c0, %c0_1] : memref<32x128xf32, #tpu.memory_space<vmem>>, vector<32x128xf32>
    %c0_2 = arith.constant 0 : index
    %c0_3 = arith.constant 0 : index
    %7 = vector.load %arg3[%c0_2, %c0_3] : memref<32x128xf32, #tpu.memory_space<vmem>>, vector<32x128xf32>
    %8 = arith.subf %6, %7 : vector<32x128xf32>
    %9 = arith.mulf %8, %8 : vector<32x128xf32>
    %10 = arith.mulf %7, %7 : vector<32x128xf32>
    %cst = arith.constant 0.00999999977 : f32
    %11 = vector.broadcast %cst : f32 to vector<32x128xf32>
    %12 = arith.addf %10, %11 : vector<32x128xf32>
    %13 = tpu.reciprocal %12 {approx = true} : vector<32x128xf32> -> vector<32x128xf32>
    %14 = arith.mulf %9, %13 : vector<32x128xf32>
    %c0_i32_4 = arith.constant 0 : i32
    %15 = arith.addi %5, %c0_i32_4 : i32
    %c32_i32_5 = arith.constant 32 : i32
    %16 = arith.addi %15, %c32_i32_5 : i32
    %c16_i32 = arith.constant 16 : i32
    %17 = arith.cmpi sle, %16, %c16_i32 : i32
    %18 = arith.extui %17 : i1 to i32
    %c0_i32_6 = arith.constant 0 : i32
    %19 = arith.cmpi ne, %18, %c0_i32_6 : i32
    scf.if %19 {
      %c0_13 = arith.constant 0 : index
      %c0_14 = arith.constant 0 : index
      %29 = vector.load %arg5[%c0_13, %c0_14] : memref<8x128xf32, #tpu.memory_space<vmem>>, vector<8x128xf32>
      %30 = vector.shape_cast %14 : vector<32x128xf32> to vector<4x8x128xf32>
      %cst_15 = arith.constant dense<0.000000e+00> : vector<8x128xf32>
      %31 = vector.multi_reduction <add>, %30, %cst_15 [0] : vector<4x8x128xf32> to vector<8x128xf32>
      %32 = arith.addf %29, %31 : vector<8x128xf32>
      %c0_16 = arith.constant 0 : index
      %c0_17 = arith.constant 0 : index
      %33 = vector.load %arg5[%c0_16, %c0_17] : memref<8x128xf32, #tpu.memory_space<vmem>>, vector<8x128xf32>
      tpu.vector_store %arg5[%c0_16, %c0_17], %32 {strides = array<i32>} : memref<8x128xf32, #tpu.memory_space<vmem>>, vector<8x128xf32>,
    } else {
    }
    %c16_i32_7 = arith.constant 16 : i32
    %20 = arith.cmpi slt, %15, %c16_i32_7 : i32
    %c32_i32_8 = arith.constant 32 : i32
    %21 = arith.addi %15, %c32_i32_8 : i32
    %c16_i32_9 = arith.constant 16 : i32
    %22 = arith.cmpi sgt, %21, %c16_i32_9 : i32
    %23 = arith.andi %20, %22 : i1
    %24 = arith.extui %23 : i1 to i32
    %c0_i32_10 = arith.constant 0 : i32
    %25 = arith.cmpi ne, %24, %c0_i32_10 : i32
    scf.if %25 {
      %29 = tpu.iota {dimensions = array<i32: 0>} : vector<32x128xi32>
      %30 = vector.broadcast %15 : i32 to vector<32x128xi32>
      %31 = arith.addi %30, %29 : vector<32x128xi32>
      %c0_13 = arith.constant 0 : index
      %c0_14 = arith.constant 0 : index
      %32 = vector.load %arg5[%c0_13, %c0_14] : memref<8x128xf32, #tpu.memory_space<vmem>>, vector<8x128xf32>
      %c16_i32_15 = arith.constant 16 : i32
      %33 = vector.broadcast %c16_i32_15 : i32 to vector<32x128xi32>
      %34 = arith.cmpi slt, %31, %33 : vector<32x128xi32>
      %cst_16 = arith.constant 0.000000e+00 : f32
      %35 = vector.broadcast %cst_16 : f32 to vector<32x128xf32>
      %36 = arith.select %34, %14, %35 : vector<32x128xi1>, vector<32x128xf32>
      %37 = vector.shape_cast %36 : vector<32x128xf32> to vector<4x8x128xf32>
      %cst_17 = arith.constant dense<0.000000e+00> : vector<8x128xf32>
      %38 = vector.multi_reduction <add>, %37, %cst_17 [0] : vector<4x8x128xf32> to vector<8x128xf32>
      %39 = arith.addf %32, %38 : vector<8x128xf32>
      %c0_18 = arith.constant 0 : index
      %c0_19 = arith.constant 0 : index
      %40 = vector.load %arg5[%c0_18, %c0_19] : memref<8x128xf32, #tpu.memory_space<vmem>>, vector<8x128xf32>
      tpu.vector_store %arg5[%c0_18, %c0_19], %39 {strides = array<i32>} : memref<8x128xf32, #tpu.memory_space<vmem>>, vector<8x128xf32>,
    } else {
    }
    %c0_i32_11 = arith.constant 0 : i32
    %26 = arith.cmpi eq, %arg1, %c0_i32_11 : i32
    %27 = arith.extui %26 : i1 to i32
    %c0_i32_12 = arith.constant 0 : i32
    %28 = arith.cmpi ne, %27, %c0_i32_12 : i32
    scf.if %28 {
      %c0_13 = arith.constant 0 : index
      %c0_14 = arith.constant 0 : index
      %29 = vector.load %arg5[%c0_13, %c0_14] : memref<8x128xf32, #tpu.memory_space<vmem>>, vector<8x128xf32>
      %cst_15 = arith.constant 2.44140625E-4 : f32
      %30 = vector.broadcast %cst_15 : f32 to vector<8x128xf32>
      %31 = arith.mulf %29, %30 : vector<8x128xf32>
      %c0_16 = arith.constant 0 : index
      %c0_17 = arith.constant 0 : index
      %32 = vector.load %arg4[%c0_16, %c0_17] : memref<8x128xf32, #tpu.memory_space<vmem>>, vector<8x128xf32>
      tpu.vector_store %arg4[%c0_16, %c0_17], %31 {strides = array<i32>} : memref<8x128xf32, #tpu.memory_space<vmem>>, vector<8x128xf32>,
    } else {
    }
    return
  }
  func.func @transform_0(%arg0: i32, %arg1: i32) -> (i32, i32) {
    %c1_i32 = arith.constant 1 : i32
    %0 = arith.muli %arg0, %c1_i32 : i32
    %1 = arith.addi %0, %arg1 : i32
    %c0_i32 = arith.constant 0 : i32
    %2 = arith.minsi %1, %c0_i32 : i32
    %c0_i32_0 = arith.constant 0 : i32
    %c0_i32_1 = arith.constant 0 : i32
    return %2, %c0_i32_0 : i32, i32
  }
  func.func @transform_1(%arg0: i32, %arg1: i32) -> (i32, i32) {
    %c1_i32 = arith.constant 1 : i32
    %0 = arith.muli %arg0, %c1_i32 : i32
    %1 = arith.addi %0, %arg1 : i32
    %c0_i32 = arith.constant 0 : i32
    %2 = arith.minsi %1, %c0_i32 : i32
    %c0_i32_0 = arith.constant 0 : i32
    %c0_i32_1 = arith.constant 0 : i32
    return %2, %c0_i32_0 : i32, i32
  }
  func.func @transform_2(%arg0: i32, %arg1: i32) -> (i32, i32) {
    %c0_i32 = arith.constant 0 : i32
    %c0_i32_0 = arith.constant 0 : i32
    return %arg0, %c0_i32 : i32, i32
  }
}

</mosaic_0001>

<llo_original>
// kernel: tpu_custom_call.1
$region0: #{tpu_custom_call.1}
  #allocation0 [shape = 'u32[]', space=smem, size = 0x4, offset = 0x4, fixed_abs, tag = 'smem constant byte address 0x4 - core index']
  #allocation1 [shape = 'u32[144,128]{1,0:T(1,128)}', space=vmem, size = 0x12000, scoped, tag = 'internal scratch']
  #allocation2 [shape = 'f32[8,128]{1,0:T(8,128)}', space=vmem, size = 0x1000, scoped, tag = 'scratch operand']
  %s0 = inlined_call_operand.hbm [shape: f32[16,128], index: 0, kind: input, shape index: {}]
  %s1 = inlined_call_operand.hbm [shape: f32[16,128], index: 1, kind: input, shape index: {}]
  %s2 = inlined_call_operand.hbm [shape: f32[8,128], index: 2, kind: output, shape index: {}]
  %s3 = sld [smem:[#allocation0]]
  $region42: #{tpu_custom_call.1} parent=0
    _
  %s5 = ssub.s32 1, %s3
  %s6 = scalar_select 0, %s5, %s3
  $region1: #{tpu_custom_call.1} parent=0
    #allocation3 [shape = 'u8[16384]{0}', space=vmem, size = 0x4000, scoped, tag = 'input window, operand 0, single buffered']
    #allocation4 [shape = 's32[1]{0}', space=sflag, size = 0x4, scoped, tag = 'scoped memory for tpu_custom_call.1']
    #allocation5 [shape = 's32[1]{0}', space=sflag, size = 0x4, scoped, tag = 'scoped memory for tpu_custom_call.1']
    #allocation6 [shape = 'u8[16384]{0}', space=vmem, size = 0x4000, scoped, tag = 'input window, operand 1, single buffered']
    #allocation7 [shape = 's32[1]{0}', space=sflag, size = 0x4, scoped, tag = 'scoped memory for tpu_custom_call.1']
    #allocation8 [shape = 'u8[4096]{0}', space=vmem, size = 0x1000, scoped, tag = 'output window, operand 0, single buffered']
    %7 = vsyncpa [#allocation4], 0
    %8 = vsyncpa [#allocation7], 0
    %9 = vsyncpa [#allocation5], 0
    // Predicated region
    $region2: #{tpu_custom_call.1} parent=1 // pred_check
      _
    $region3: #{tpu_custom_call.1} parent=1 // pred_check_branch
      %11 = sbr.rel (0) target = $region5
    $region4: #{tpu_custom_call.1} parent=1 // pred_region
      %s12 = sadd.s32 0, 0
      %p13 = scmp.lt.s32.totalorder %s12, 0
      %s14 = scalar_select %p13, %s12, 0
      %s15 = smul.u32 4, %s14
      %s16 = ssub.s32 2, %s15
      %s17 = smul.u32 128, %s16
      %s19 = ssub.s32 512, %s17
      %20 = vsyncadd [#allocation4], %s19
      %p21 = scmp.ne.s32.totalorder 0, %s17
      %s22 = smul.addr %s15, 128
      %s23 = scalar_lea.hbm %s0, %s22
      %s24 = smul.u32 8, %s16
      %s25 = sshll.u32 [#allocation3], 4
      %s26 = int_to_ptr.vmem [resolvable:$true] %s25
      %s27 = sshll.u32 %s24, 4
      %31 = dma.hbm_to_vmem [thread:$0]  (%p21), %s23, %s27, %s26, [#allocation4], 128, 128, 8
    $region5: #{tpu_custom_call.1} parent=1 // pred_fallthru
      _
    // Predicated region
    $region6: #{tpu_custom_call.1} parent=1 // pred_check
      _
    $region7: #{tpu_custom_call.1} parent=1 // pred_check_branch
      %33 = sbr.rel (0) target = $region9
    $region8: #{tpu_custom_call.1} parent=1 // pred_region
      %s34 = sadd.s32 0, 0
      %p35 = scmp.lt.s32.totalorder %s34, 0
      %s36 = scalar_select %p35, %s34, 0
      %s37 = smul.u32 4, %s36
      %s38 = ssub.s32 2, %s37
      %s39 = smul.u32 128, %s38
      %s41 = ssub.s32 512, %s39
      %42 = vsyncadd [#allocation7], %s41
      %p43 = scmp.ne.s32.totalorder 0, %s39
      %s44 = smul.addr %s37, 128
      %s45 = scalar_lea.hbm %s1, %s44
      %s46 = smul.u32 8, %s38
      %s47 = sshll.u32 [#allocation6], 4
      %s48 = int_to_ptr.vmem [resolvable:$true] %s47
      %s49 = sshll.u32 %s46, 4
      %53 = dma.hbm_to_vmem [thread:$0]  (%p43), %s45, %s49, %s48, [#allocation7], 128, 128, 8
    $region9: #{tpu_custom_call.1} parent=1 // pred_fallthru
      _
    // Predicated region
    $region10: #{tpu_custom_call.1} parent=1 // pred_check
      _
    $region11: #{tpu_custom_call.1} parent=1 // pred_check_branch
      %55 = sbr.rel (0) target = $region13
    $region12: #{tpu_custom_call.1} parent=1 // pred_region
      %56 = dma.done [#allocation4], 512
    $region13: #{tpu_custom_call.1} parent=1 // pred_fallthru
      _
    // Predicated region
    $region14: #{tpu_custom_call.1} parent=1 // pred_check
      _
    $region15: #{tpu_custom_call.1} parent=1 // pred_check_branch
      %58 = sbr.rel (0) target = $region17
    $region16: #{tpu_custom_call.1} parent=1 // pred_region
      %59 = dma.done [#allocation7], 512
    $region17: #{tpu_custom_call.1} parent=1 // pred_fallthru
      _
    %s60 = sadd.s32 0, 0
    %p61 = scmp.lt.s32.totalorder %s60, 0
    %s62 = scalar_select %p61, %s60, 0
    %s63 = smul.u32 4, %s62
    %s64 = ssub.s32 2, %s63
    %s65 = smul.u32 128, %s64
    %s66 = sadd.s32 0, 0
    %p67 = scmp.lt.s32.totalorder %s66, 0
    %s68 = scalar_select %p67, %s66, 0
    %s69 = smul.u32 4, %s68
    %s70 = ssub.s32 2, %s69
    %s71 = smul.u32 128, %s70
    %p72 = scmp.eq.s32.totalorder 0, 0
    // Predicated region
    $region18: #{tpu_custom_call.1} parent=1 // pred_check
      %p73 = pneg %p72
    $region19: #{tpu_custom_call.1} parent=1 // pred_check_branch
      %75 = sbr.rel (%p73) target = $region21
    $region20: #{tpu_custom_call.1} parent=1 // pred_region
      %76 = vst [vmem:[#allocation2] sm:$0xff] 0.0
    $region21: #{tpu_custom_call.1} parent=1 // pred_fallthru
      _
    %s77 = sadd.s32 0, 0
    %s78 = smul.u32 %s77, 32
    %v79 = vld [vmem:[#allocation3] sm:$0xff]
    %v80 = vld [vmem:[#allocation3 + $0x8] sm:$0xff]
    %v81 = vld [vmem:[#allocation3 + $0x10] sm:$0xff]
    %v82 = vld [vmem:[#allocation3 + $0x18] sm:$0xff]
    %v83 = vld [vmem:[#allocation6] sm:$0xff]
    %v84 = vld [vmem:[#allocation6 + $0x8] sm:$0xff]
    %v85 = vld [vmem:[#allocation6 + $0x10] sm:$0xff]
    %v86 = vld [vmem:[#allocation6 + $0x18] sm:$0xff]
    %v87 = vsub.f32 %v79, %v83
    %v88 = vsub.f32 %v80, %v84
    %v89 = vsub.f32 %v81, %v85
    %v90 = vsub.f32 %v82, %v86
    %v91 = vmul.f32 %v87, %v87
    %v92 = vmul.f32 %v88, %v88
    %v93 = vmul.f32 %v89, %v89
    %v94 = vmul.f32 %v90, %v90
    %v95 = vmul.f32 %v83, %v83
    %v96 = vmul.f32 %v84, %v84
    %v97 = vmul.f32 %v85, %v85
    %v98 = vmul.f32 %v86, %v86
    %v99 = vadd.f32 %v95, 0.01
    %v100 = vadd.f32 %v96, 0.01
    %v101 = vadd.f32 %v97, 0.01
    %v102 = vadd.f32 %v98, 0.01
    %v103 = vrcp.pop %v99
    %v104 = vrcp.pop %v100
    %v105 = vrcp.pop %v101
    %v106 = vrcp.pop %v102
    %v107 = vmul.f32 %v91, %v103
    %v108 = vmul.f32 %v92, %v104
    %v109 = vmul.f32 %v93, %v105
    %v110 = vmul.f32 %v94, %v106
    %s111 = sadd.s32 %s78, 32
    %p112 = scmp.le.s32.totalorder %s111, 16
    // Predicated region
    $region22: #{tpu_custom_call.1} parent=1 // pred_check
      %p113 = pneg %p112
    $region23: #{tpu_custom_call.1} parent=1 // pred_check_branch
      %115 = sbr.rel (%p113) target = $region25
    $region24: #{tpu_custom_call.1} parent=1 // pred_region
      %v116 = vld [vmem:[#allocation2] sm:$0xff]
      %v117 = vadd.f32 %v107, %v108
      %v118 = vadd.f32 %v117, %v109
      %v119 = vadd.f32 %v118, %v110
      %v120 = vadd.f32 %v116, %v119
      %121 = vst [vmem:[#allocation2] sm:$0xff] %v120
    $region25: #{tpu_custom_call.1} parent=1 // pred_fallthru
      _
    %p122 = scmp.lt.s32.totalorder %s78, 16
    %p123 = scmp.gt.s32.totalorder %s111, 16
    %p124 = pnand %p122, %p123
    %p125 = pneg %p124
    // Predicated region
    $region26: #{tpu_custom_call.1} parent=1 // pred_check
      _
    $region27: #{tpu_custom_call.1} parent=1 // pred_check_branch
      %127 = sbr.rel (%p124) target = $region29
    $region28: #{tpu_custom_call.1} parent=1 // pred_region
      %v128 = vlaneseq
      %v129 = vshrl.u32 %v128, 7
      %v130 = vadd.s32 %v129, 8
      %v131 = vadd.s32 %v129, 16
      %v132 = vadd.s32 %v129, 24
      %v133 = vstv %s78
      %v134 = vadd.s32 %v133, %v129
      %v135 = vadd.s32 %v133, %v130
      %v136 = vadd.s32 %v133, %v131
      %v137 = vadd.s32 %v133, %v132
      %v138 = vld [vmem:[#allocation2] sm:$0xff]
      %vm139 = vcmp.lt.s32.totalorder %v134, 16
      %vm140 = vcmp.lt.s32.totalorder %v135, 16
      %vm141 = vcmp.lt.s32.totalorder %v136, 16
      %vm142 = vcmp.lt.s32.totalorder %v137, 16
      %v143 = vsel %vm139, %v107, 0.0
      %v144 = vsel %vm140, %v108, 0.0
      %v145 = vsel %vm141, %v109, 0.0
      %v146 = vsel %vm142, %v110, 0.0
      %v147 = vadd.f32 %v143, %v144
      %v148 = vadd.f32 %v147, %v145
      %v149 = vadd.f32 %v148, %v146
      %v150 = vadd.f32 %v138, %v149
      %151 = vst [vmem:[#allocation2] sm:$0xff] %v150
    $region29: #{tpu_custom_call.1} parent=1 // pred_fallthru
      _
    // Predicated region
    $region30: #{tpu_custom_call.1} parent=1 // pred_check
      %p152 = pneg %p72
    $region31: #{tpu_custom_call.1} parent=1 // pred_check_branch
      %154 = sbr.rel (%p152) target = $region33
    $region32: #{tpu_custom_call.1} parent=1 // pred_region
      %v155 = vld [vmem:[#allocation2] sm:$0xff]
      %v156 = vmul.f32 %v155, 0.00024414063
      %157 = vst [vmem:[#allocation8] sm:$0xff] %v156
    $region33: #{tpu_custom_call.1} parent=1 // pred_fallthru
      _
    // Predicated region
    $region34: #{tpu_custom_call.1} parent=1 // pred_check
      _
    $region35: #{tpu_custom_call.1} parent=1 // pred_check_branch
      %159 = sbr.rel (0) target = $region37
    $region36: #{tpu_custom_call.1} parent=1 // pred_region
      %s161 = ssub.s32 128, 128
      %162 = vsyncadd [#allocation5], %s161
      %s164 = sshll.u32 [#allocation8], 4
      %s165 = int_to_ptr.vmem [resolvable:$true] %s164
      %167 = dma.vmem_to_hbm [thread:$0]  %s165, 128, %s2, [#allocation5]
    $region37: #{tpu_custom_call.1} parent=1 // pred_fallthru
      _
    // Predicated region
    $region38: #{tpu_custom_call.1} parent=1 // pred_check
      _
    $region39: #{tpu_custom_call.1} parent=1 // pred_check_branch
      %169 = sbr.rel (0) target = $region41
    $region40: #{tpu_custom_call.1} parent=1 // pred_region
      %170 = dma.done [#allocation5], 128
    $region41: #{tpu_custom_call.1} parent=1 // pred_fallthru
      _
    %171 = vsyncpa [#allocation4], 1
    %172 = vsyncpa [#allocation7], 1
    %173 = vsyncpa [#allocation5], 1

</llo_original>
